<compile_context>
chip_gen: v5e
topology: v5e:2x2
jax: 0.10.0
libtpu: 0.0.40
codegen_flags: <defaults>
</compile_context>

<pallas_src>
import jax
import jax.numpy as jnp
from jax.experimental import pallas as pl
from jax.experimental.pallas import tpu as pltpu


def _round_up(x, m):
    return ((x + m - 1) // m) * m


def _choose_row_tile(n, tm):
    """Pick (row_tile, grid) for a row-tiled launch over n rows.

    * n <= tm: one tile whose block equals the full array dims (no 8-row
      divisibility requirement in that case).
    * otherwise: multiple-of-8 row tiles, split over an EVEN number of tiles
      so both TensorCores of a 2-TC chip (v7x) get balanced work under
      dimension_semantics=("parallel",).
    The grid is a cdiv grid — no host-side padding of x.
    """
    if n <= tm:
        return n, 1
    num_tiles = pl.cdiv(n, tm)
    if num_tiles % 2:
        num_tiles += 1
    tm_eff = _round_up(pl.cdiv(n, num_tiles), 8)
    return tm_eff, pl.cdiv(n, tm_eff)


def fuse_params(w1, b1, w2, b2):
    """Both layers are affine with no activation in between, so collapse them
    once, OFF the per-call hot path:  y = x @ (W1@W2) + (b1@W2 + b2).
    Kept in f32 so the single fused matmul stays within tolerance of the
    two-step reference (important if activations ever move to bf16)."""
    w1f = w1.astype(jnp.float32)
    w2f = w2.astype(jnp.float32)
    wf = jnp.dot(w1f, w2f, preferred_element_type=jnp.float32)
    bf = (jnp.dot(b1.astype(jnp.float32), w2f,
                  preferred_element_type=jnp.float32)
          + b2.astype(jnp.float32))
    return wf, bf


def _forward_kernel(x_ref, wf_ref, bf_ref, out_ref):
    # x_ref:  (tm, input_dim)        wf_ref: (input_dim, num_classes)
    # bf_ref: (1, num_classes)       out_ref:(tm, num_classes)  -- unpadded
    acc = jnp.dot(x_ref[...], wf_ref[...], preferred_element_type=jnp.float32)
    out_ref[...] = (acc + bf_ref[...]).astype(out_ref.dtype)


def avg_mil_forward(x, wf, bf, *, tm=8192):
    """Fused forward:  classifier(aggregator(x)) = x @ Wf + bf."""
    n, input_dim = x.shape
    num_classes = wf.shape[1]
    tm_eff, grid = _choose_row_tile(n, tm)

    # NOTE(correctness): cdiv grid, no row padding.  The tail tile may read
    # out-of-bounds rows (arbitrary HBM contents).  That is safe ONLY because
    # every output row depends on exactly one input row, and the OOB output
    # rows land in the output array's physical padding and are never read.
    # Do NOT add any cross-row reduction to this kernel without masking.
    return pl.pallas_call(
        _forward_kernel,
        out_shape=jax.ShapeDtypeStruct((n, num_classes), x.dtype),
        grid_spec=pltpu.PrefetchScalarGridSpec(
            num_scalar_prefetch=0,
            grid=(grid,),
            in_specs=[
                pl.BlockSpec((tm_eff, input_dim), lambda i: (i, 0)),
                # Constant index maps -> weights / bias stay resident in VMEM.
                pl.BlockSpec((input_dim, num_classes), lambda i: (0, 0)),
                pl.BlockSpec((1, num_classes), lambda i: (0, 0)),
            ],
            # Unpadded, lane-narrow output block: masked 8-lane stores, but
            # 16x fewer HBM bytes than 128-lane padding and no slice pass.
            out_specs=pl.BlockSpec((tm_eff, num_classes), lambda i: (i, 0)),
        ),
        compiler_params=pltpu.CompilerParams(
            dimension_semantics=("parallel",)),
    )(x, wf, bf)


def avg_mil_inference(x, wf, bf, input_dim, *, tm=8192):
    """AvgMIL.inference: reshape -> forward -> mean -> softmax -> argmax.

    mean() commutes with the affine layers, so the kernel accumulates the
    column-sum of x over row tiles (x read from HBM exactly once) and does the
    1 x K @ K x C matmul + bias on the last grid step.
    """
    x2 = x.reshape(-1, input_dim)
    n = x2.shape[0]
    num_classes = wf.shape[1]
    tm_eff, grid = _choose_row_tile(n, tm)
    inv_n = 1.0 / n

    def kernel(x_ref, wf_ref, bf_ref, out_ref, sum_sc):
        i = pl.program_id(0)

        @pl.when(i == 0)
        def _():
            sum_sc[...] = jnp.zeros_like(sum_sc)

        # This kernel reduces across rows, so out-of-bounds rows of the cdiv
        # tail tile MUST be masked out before the sum.
        blk = x_ref.shape[0]
        row_ids = i * blk + jax.lax.broadcasted_iota(jnp.int32, (blk, 1), 0)
        xv = jnp.where(row_ids < n, x_ref[...].astype(jnp.float32), 0.0)
        sum_sc[...] += jnp.sum(xv, axis=0, keepdims=True)

        @pl.when(i == pl.num_programs(0) - 1)
        def _():
            mean = sum_sc[...] * inv_n
            logits = jnp.dot(mean, wf_ref[...],
                             preferred_element_type=jnp.float32) + bf_ref[...]
            out_ref[...] = logits.astype(out_ref.dtype)

    logits = pl.pallas_call(
        kernel,
        out_shape=jax.ShapeDtypeStruct((1, num_classes), jnp.float32),
        grid_spec=pltpu.PrefetchScalarGridSpec(
            num_scalar_prefetch=0,
            grid=(grid,),
            in_specs=[
                pl.BlockSpec((tm_eff, input_dim), lambda i: (i, 0)),
                pl.BlockSpec((input_dim, num_classes), lambda i: (0, 0)),
                pl.BlockSpec((1, num_classes), lambda i: (0, 0)),
            ],
            # Constant output block index across the reduction axis ->
            # resident accumulator; written back once at the end.
            out_specs=pl.BlockSpec((1, num_classes), lambda i: (0, 0)),
            scratch_shapes=[pltpu.VMEM((1, input_dim), jnp.float32)],
        ),
        compiler_params=pltpu.CompilerParams(
            dimension_semantics=("arbitrary",)),
    )(x2, wf, bf)

    # num_classes == 8: softmax/argmax are a handful of VPU ops -> plain jnp.
    prob = jax.nn.softmax(logits[0], axis=-1)
    return jnp.argmax(prob, axis=-1)


if __name__ == "__main__":
    # Config implied by the module: input_dim, embed_dim, num_classes.
    N = 1024
    INPUT_DIM = 32
    EMBED_DIM = 32
    NUM_CLASSES = 8

    key = jax.random.PRNGKey(0)
    kx, kw1, kb1, kw2, kb2 = jax.random.split(key, 5)

    x = jax.random.normal(kx, (N, INPUT_DIM), dtype=jnp.float32)
    # nn.Linear weights stored pre-transposed as [in_features, out_features].
    w1 = jax.random.normal(kw1, (INPUT_DIM, EMBED_DIM), dtype=jnp.float32) * 0.05
    b1 = jax.random.normal(kb1, (1, EMBED_DIM), dtype=jnp.float32) * 0.05
    w2 = jax.random.normal(kw2, (EMBED_DIM, NUM_CLASSES), dtype=jnp.float32) * 0.05
    b2 = jax.random.normal(kb2, (1, NUM_CLASSES), dtype=jnp.float32) * 0.05

    # One-time algebraic fusion (off the per-call hot path).
    wf, bf = fuse_params(w1, b1, w2, b2)

    # Pure-JAX reference (two-step, exactly the PyTorch forward semantics).
    ref = (x @ w1 + b1) @ w2 + b2

    # --- single-tile path (default large tm) ---
    y = jax.block_until_ready(avg_mil_forward(x, wf, bf))
    assert y.shape == (N, NUM_CLASSES)
    assert jnp.allclose(y, ref, atol=1e-4, rtol=1e-4), "forward mismatch"

    # --- multi-tile path with a partial (cdiv) tail tile ---
    x_odd = x[:777]
    ref_odd = (x_odd @ w1 + b1) @ w2 + b2
    y_odd = jax.block_until_ready(avg_mil_forward(x_odd, wf, bf, tm=256))
    assert y_odd.shape == (777, NUM_CLASSES)
    assert jnp.allclose(y_odd, ref_odd, atol=1e-4, rtol=1e-4), "tail-tile mismatch"

    # --- inference path (column-mean fused into the kernel) ---
    pred = jax.block_until_ready(avg_mil_inference(x, wf, bf, INPUT_DIM, tm=256))
    ref_pred = jnp.argmax(jax.nn.softmax(ref.mean(axis=0), axis=-1), axis=-1)
    assert pred.shape == ()
    assert int(pred) == int(ref_pred), "inference prediction mismatch"

    # inference with a masked partial tail tile (n % tile != 0)
    pred_odd = jax.block_until_ready(
        avg_mil_inference(x_odd, wf, bf, INPUT_DIM, tm=256))
    ref_pred_odd = jnp.argmax(jax.nn.softmax(ref_odd.mean(axis=0), axis=-1), axis=-1)
    assert int(pred_odd) == int(ref_pred_odd), "inference (tail) mismatch"

    print("KERNEL_OK")
</pallas_src>

<mosaic_0001>
module attributes {stable_mosaic.version = 11 : i64} {
  func.func @_forward_kernel(%arg0: i32, %arg1: memref<1024x32xf32, #tpu.memory_space<vmem>>, %arg2: memref<32x8xf32, #tpu.memory_space<vmem>>, %arg3: memref<1x8xf32, #tpu.memory_space<vmem>>, %arg4: memref<1024x8xf32, #tpu.memory_space<vmem>>) attributes {dimension_semantics = [#tpu.dimension_semantics<parallel>], iteration_bounds = array<i64: 1>, scalar_prefetch = 0 : i64, scratch_operands = 0 : i64, tpu.core_type = #tpu.core_type<tc>, window_params = [{transform_indices = @transform_0, window_bounds = array<i64: 1024, 32>}, {pipeline_mode = #tpu.pipeline_mode<synchronous>, transform_indices = @transform_1, window_bounds = array<i64: 32, 8>}, {pipeline_mode = #tpu.pipeline_mode<synchronous>, transform_indices = @transform_2, window_bounds = array<i64: 1, 8>}, {transform_indices = @transform_3, window_bounds = array<i64: 1024, 8>}]} {
    %c0 = arith.constant 0 : index
    %c0_0 = arith.constant 0 : index
    %0 = vector.load %arg1[%c0, %c0_0] : memref<1024x32xf32, #tpu.memory_space<vmem>>, vector<1024x32xf32>
    %c0_1 = arith.constant 0 : index
    %c0_2 = arith.constant 0 : index
    %1 = vector.load %arg2[%c0_1, %c0_2] : memref<32x8xf32, #tpu.memory_space<vmem>>, vector<32x8xf32>
    %cst = arith.constant dense<0.000000e+00> : vector<1024x8xf32>
    %2 = tpu.matmul %0, %1, %cst {dimension_numbers = #tpu.dot_dimension_numbers<[1], [0], [0], [1], [0, 0, 1, 1], [], []>} : vector<1024x32xf32>, vector<32x8xf32>, vector<1024x8xf32> -> vector<1024x8xf32>
    %c0_3 = arith.constant 0 : index
    %c0_4 = arith.constant 0 : index
    %3 = vector.load %arg3[%c0_3, %c0_4] : memref<1x8xf32, #tpu.memory_space<vmem>>, vector<1x8xf32>
    %4 = vector.broadcast %3 : vector<1x8xf32> to vector<1024x8xf32>
    %5 = arith.addf %2, %4 : vector<1024x8xf32>
    %c0_5 = arith.constant 0 : index
    %c0_6 = arith.constant 0 : index
    %6 = vector.load %arg4[%c0_5, %c0_6] : memref<1024x8xf32, #tpu.memory_space<vmem>>, vector<1024x8xf32>
    tpu.vector_store %arg4[%c0_5, %c0_6], %5 {strides = array<i32>} : memref<1024x8xf32, #tpu.memory_space<vmem>>, vector<1024x8xf32>,
    return
  }
  func.func @transform_0(%arg0: i32) -> (i32, i32) {
    %c0_i32 = arith.constant 0 : i32
    %c0_i32_0 = arith.constant 0 : i32
    return %arg0, %c0_i32 : i32, i32
  }
  func.func @transform_1(%arg0: i32) -> (i32, i32) {
    %c0_i32 = arith.constant 0 : i32
    %c0_i32_0 = arith.constant 0 : i32
    %c0_i32_1 = arith.constant 0 : i32
    return %c0_i32, %c0_i32_0 : i32, i32
  }
  func.func @transform_2(%arg0: i32) -> (i32, i32) {
    %c0_i32 = arith.constant 0 : i32
    %c0_i32_0 = arith.constant 0 : i32
    %c0_i32_1 = arith.constant 0 : i32
    return %c0_i32, %c0_i32_0 : i32, i32
  }
  func.func @transform_3(%arg0: i32) -> (i32, i32) {
    %c0_i32 = arith.constant 0 : i32
    %c0_i32_0 = arith.constant 0 : i32
    return %arg0, %c0_i32 : i32, i32
  }
}

</mosaic_0001>

<llo_original>
// kernel: tpu_custom_call.1
$region0: #{tpu_custom_call.1}
  #allocation0 [shape = 'u32[]', space=smem, size = 0x4, offset = 0x4, fixed_abs, tag = 'smem constant byte address 0x4 - core index']
  #allocation1 [shape = 'u32[72,128]{1,0:T(1,128)}', space=vmem, size = 0x9000, scoped, tag = 'internal scratch']
  %s0 = inlined_call_operand.vmem [shape: f32[1024,32], index: 0, kind: input, shape index: {}]
  %s1 = inlined_call_operand.vmem [shape: f32[32,8], index: 1, kind: input, shape index: {}]
  %s2 = inlined_call_operand.vmem [shape: f32[1,8], index: 2, kind: input, shape index: {}]
  %s3 = inlined_call_operand.vmem [shape: f32[1024,8], index: 3, kind: output, shape index: {}]
  %s4 = sld [smem:[#allocation0]]
  $region22: #{tpu_custom_call.1} parent=0
    _
  %s6 = ssub.s32 1, %s4
  %s7 = scalar_select 0, %s6, %s4
  // Predicated region
  $region2: #{tpu_custom_call.1} parent=0 // pred_check
    _
  $region3: #{tpu_custom_call.1} parent=0 // pred_check_branch
    %9 = sbr.rel (0) target = $region5
  $region4: #{tpu_custom_call.1} parent=0 // pred_region
    _
  $region5: #{tpu_custom_call.1} parent=0 // pred_fallthru
    _
  // Predicated region
  $region6: #{tpu_custom_call.1} parent=0 // pred_check
    _
  $region7: #{tpu_custom_call.1} parent=0 // pred_check_branch
    %11 = sbr.rel (0) target = $region9
  $region8: #{tpu_custom_call.1} parent=0 // pred_region
    _
  $region9: #{tpu_custom_call.1} parent=0 // pred_fallthru
    _
  // Predicated region
  $region10: #{tpu_custom_call.1} parent=0 // pred_check
    _
  $region11: #{tpu_custom_call.1} parent=0 // pred_check_branch
    %13 = sbr.rel (0) target = $region13
  $region12: #{tpu_custom_call.1} parent=0 // pred_region
    _
  $region13: #{tpu_custom_call.1} parent=0 // pred_fallthru
    _
  %v14 = vld [vmem:[%s0] sm:$0xff]
  %v15 = vld [vmem:[%s0 + $0x8] sm:$0xff]
  %v16 = vld [vmem:[%s0 + $0x10] sm:$0xff]
  %v17 = vld [vmem:[%s0 + $0x18] sm:$0xff]
  %v18 = vld [vmem:[%s0 + $0x20] sm:$0xff]
  %v19 = vld [vmem:[%s0 + $0x28] sm:$0xff]
  %v20 = vld [vmem:[%s0 + $0x30] sm:$0xff]
  %v21 = vld [vmem:[%s0 + $0x38] sm:$0xff]
  %v22 = vld [vmem:[%s0 + $0x40] sm:$0xff]
  %v23 = vld [vmem:[%s0 + $0x48] sm:$0xff]
  %v24 = vld [vmem:[%s0 + $0x50] sm:$0xff]
  %v25 = vld [vmem:[%s0 + $0x58] sm:$0xff]
  %v26 = vld [vmem:[%s0 + $0x60] sm:$0xff]
  %v27 = vld [vmem:[%s0 + $0x68] sm:$0xff]
  %v28 = vld [vmem:[%s0 + $0x70] sm:$0xff]
  %v29 = vld [vmem:[%s0 + $0x78] sm:$0xff]
  %v30 = vld [vmem:[%s0 + $0x80] sm:$0xff]
  %v31 = vld [vmem:[%s0 + $0x88] sm:$0xff]
  %v32 = vld [vmem:[%s0 + $0x90] sm:$0xff]
  %v33 = vld [vmem:[%s0 + $0x98] sm:$0xff]
  %v34 = vld [vmem:[%s0 + $0xa0] sm:$0xff]
  %v35 = vld [vmem:[%s0 + $0xa8] sm:$0xff]
  %v36 = vld [vmem:[%s0 + $0xb0] sm:$0xff]
  %v37 = vld [vmem:[%s0 + $0xb8] sm:$0xff]
  %v38 = vld [vmem:[%s0 + $0xc0] sm:$0xff]
  %v39 = vld [vmem:[%s0 + $0xc8] sm:$0xff]
  %v40 = vld [vmem:[%s0 + $0xd0] sm:$0xff]
  %v41 = vld [vmem:[%s0 + $0xd8] sm:$0xff]
  %v42 = vld [vmem:[%s0 + $0xe0] sm:$0xff]
  %v43 = vld [vmem:[%s0 + $0xe8] sm:$0xff]
  %v44 = vld [vmem:[%s0 + $0xf0] sm:$0xff]
  %v45 = vld [vmem:[%s0 + $0xf8] sm:$0xff]
  %v46 = vld [vmem:[%s0 + $0x100] sm:$0xff]
  %v47 = vld [vmem:[%s0 + $0x108] sm:$0xff]
  %v48 = vld [vmem:[%s0 + $0x110] sm:$0xff]
  %v49 = vld [vmem:[%s0 + $0x118] sm:$0xff]
  %v50 = vld [vmem:[%s0 + $0x120] sm:$0xff]
  %v51 = vld [vmem:[%s0 + $0x128] sm:$0xff]
  %v52 = vld [vmem:[%s0 + $0x130] sm:$0xff]
  %v53 = vld [vmem:[%s0 + $0x138] sm:$0xff]
  %v54 = vld [vmem:[%s0 + $0x140] sm:$0xff]
  %v55 = vld [vmem:[%s0 + $0x148] sm:$0xff]
  %v56 = vld [vmem:[%s0 + $0x150] sm:$0xff]
  %v57 = vld [vmem:[%s0 + $0x158] sm:$0xff]
  %v58 = vld [vmem:[%s0 + $0x160] sm:$0xff]
  %v59 = vld [vmem:[%s0 + $0x168] sm:$0xff]
  %v60 = vld [vmem:[%s0 + $0x170] sm:$0xff]
  %v61 = vld [vmem:[%s0 + $0x178] sm:$0xff]
  %v62 = vld [vmem:[%s0 + $0x180] sm:$0xff]
  %v63 = vld [vmem:[%s0 + $0x188] sm:$0xff]
  %v64 = vld [vmem:[%s0 + $0x190] sm:$0xff]
  %v65 = vld [vmem:[%s0 + $0x198] sm:$0xff]
  %v66 = vld [vmem:[%s0 + $0x1a0] sm:$0xff]
  %v67 = vld [vmem:[%s0 + $0x1a8] sm:$0xff]
  %v68 = vld [vmem:[%s0 + $0x1b0] sm:$0xff]
  %v69 = vld [vmem:[%s0 + $0x1b8] sm:$0xff]
  %v70 = vld [vmem:[%s0 + $0x1c0] sm:$0xff]
  %v71 = vld [vmem:[%s0 + $0x1c8] sm:$0xff]
  %v72 = vld [vmem:[%s0 + $0x1d0] sm:$0xff]
  %v73 = vld [vmem:[%s0 + $0x1d8] sm:$0xff]
  %v74 = vld [vmem:[%s0 + $0x1e0] sm:$0xff]
  %v75 = vld [vmem:[%s0 + $0x1e8] sm:$0xff]
  %v76 = vld [vmem:[%s0 + $0x1f0] sm:$0xff]
  %v77 = vld [vmem:[%s0 + $0x1f8] sm:$0xff]
  %v78 = vld [vmem:[%s0 + $0x200] sm:$0xff]
  %v79 = vld [vmem:[%s0 + $0x208] sm:$0xff]
  %v80 = vld [vmem:[%s0 + $0x210] sm:$0xff]
  %v81 = vld [vmem:[%s0 + $0x218] sm:$0xff]
  %v82 = vld [vmem:[%s0 + $0x220] sm:$0xff]
  %v83 = vld [vmem:[%s0 + $0x228] sm:$0xff]
  %v84 = vld [vmem:[%s0 + $0x230] sm:$0xff]
  %v85 = vld [vmem:[%s0 + $0x238] sm:$0xff]
  %v86 = vld [vmem:[%s0 + $0x240] sm:$0xff]
  %v87 = vld [vmem:[%s0 + $0x248] sm:$0xff]
  %v88 = vld [vmem:[%s0 + $0x250] sm:$0xff]
  %v89 = vld [vmem:[%s0 + $0x258] sm:$0xff]
  %v90 = vld [vmem:[%s0 + $0x260] sm:$0xff]
  %v91 = vld [vmem:[%s0 + $0x268] sm:$0xff]
  %v92 = vld [vmem:[%s0 + $0x270] sm:$0xff]
  %v93 = vld [vmem:[%s0 + $0x278] sm:$0xff]
  %v94 = vld [vmem:[%s0 + $0x280] sm:$0xff]
  %v95 = vld [vmem:[%s0 + $0x288] sm:$0xff]
  %v96 = vld [vmem:[%s0 + $0x290] sm:$0xff]
  %v97 = vld [vmem:[%s0 + $0x298] sm:$0xff]
  %v98 = vld [vmem:[%s0 + $0x2a0] sm:$0xff]
  %v99 = vld [vmem:[%s0 + $0x2a8] sm:$0xff]
  %v100 = vld [vmem:[%s0 + $0x2b0] sm:$0xff]
  %v101 = vld [vmem:[%s0 + $0x2b8] sm:$0xff]
  %v102 = vld [vmem:[%s0 + $0x2c0] sm:$0xff]
  %v103 = vld [vmem:[%s0 + $0x2c8] sm:$0xff]
  %v104 = vld [vmem:[%s0 + $0x2d0] sm:$0xff]
  %v105 = vld [vmem:[%s0 + $0x2d8] sm:$0xff]
  %v106 = vld [vmem:[%s0 + $0x2e0] sm:$0xff]
  %v107 = vld [vmem:[%s0 + $0x2e8] sm:$0xff]
  %v108 = vld [vmem:[%s0 + $0x2f0] sm:$0xff]
  %v109 = vld [vmem:[%s0 + $0x2f8] sm:$0xff]
  %v110 = vld [vmem:[%s0 + $0x300] sm:$0xff]
  %v111 = vld [vmem:[%s0 + $0x308] sm:$0xff]
  %v112 = vld [vmem:[%s0 + $0x310] sm:$0xff]
  %v113 = vld [vmem:[%s0 + $0x318] sm:$0xff]
  %v114 = vld [vmem:[%s0 + $0x320] sm:$0xff]
  %v115 = vld [vmem:[%s0 + $0x328] sm:$0xff]
  %v116 = vld [vmem:[%s0 + $0x330] sm:$0xff]
  %v117 = vld [vmem:[%s0 + $0x338] sm:$0xff]
  %v118 = vld [vmem:[%s0 + $0x340] sm:$0xff]
  %v119 = vld [vmem:[%s0 + $0x348] sm:$0xff]
  %v120 = vld [vmem:[%s0 + $0x350] sm:$0xff]
  %v121 = vld [vmem:[%s0 + $0x358] sm:$0xff]
  %v122 = vld [vmem:[%s0 + $0x360] sm:$0xff]
  %v123 = vld [vmem:[%s0 + $0x368] sm:$0xff]
  %v124 = vld [vmem:[%s0 + $0x370] sm:$0xff]
  %v125 = vld [vmem:[%s0 + $0x378] sm:$0xff]
  %v126 = vld [vmem:[%s0 + $0x380] sm:$0xff]
  %v127 = vld [vmem:[%s0 + $0x388] sm:$0xff]
  %v128 = vld [vmem:[%s0 + $0x390] sm:$0xff]
  %v129 = vld [vmem:[%s0 + $0x398] sm:$0xff]
  %v130 = vld [vmem:[%s0 + $0x3a0] sm:$0xff]
  %v131 = vld [vmem:[%s0 + $0x3a8] sm:$0xff]
  %v132 = vld [vmem:[%s0 + $0x3b0] sm:$0xff]
  %v133 = vld [vmem:[%s0 + $0x3b8] sm:$0xff]
  %v134 = vld [vmem:[%s0 + $0x3c0] sm:$0xff]
  %v135 = vld [vmem:[%s0 + $0x3c8] sm:$0xff]
  %v136 = vld [vmem:[%s0 + $0x3d0] sm:$0xff]
  %v137 = vld [vmem:[%s0 + $0x3d8] sm:$0xff]
  %v138 = vld [vmem:[%s0 + $0x3e0] sm:$0xff]
  %v139 = vld [vmem:[%s0 + $0x3e8] sm:$0xff]
  %v140 = vld [vmem:[%s0 + $0x3f0] sm:$0xff]
  %v141 = vld [vmem:[%s0 + $0x3f8] sm:$0xff]
  %v142 = vld [vmem:[%s1] sm:$0xff]
  %v143 = vld [vmem:[%s1 + $0x8] sm:$0xff]
  %v144 = vld [vmem:[%s1 + $0x10] sm:$0xff]
  %v145 = vld [vmem:[%s1 + $0x18] sm:$0xff]
  %v146 = vld [vmem:[%s2] sm:$0x1]
  %v148 = vperm.slane %v146, 0
  %vm150 = vcmask 261120
  %v152 = vsel %vm150, %v14, 0
  %v155 = vsel %vm150, %v15, 0
  %v158 = vsel %vm150, %v16, 0
  %v161 = vsel %vm150, %v17, 0
  %v164 = vsel %vm150, %v18, 0
  %v167 = vsel %vm150, %v19, 0
  %v170 = vsel %vm150, %v20, 0
  %v173 = vsel %vm150, %v21, 0
  %v176 = vsel %vm150, %v22, 0
  %v179 = vsel %vm150, %v23, 0
  %v182 = vsel %vm150, %v24, 0
  %v185 = vsel %vm150, %v25, 0
  %v188 = vsel %vm150, %v26, 0
  %v191 = vsel %vm150, %v27, 0
  %v194 = vsel %vm150, %v28, 0
  %v197 = vsel %vm150, %v29, 0
  %v200 = vsel %vm150, %v30, 0
  %v203 = vsel %vm150, %v31, 0
  %v206 = vsel %vm150, %v32, 0
  %v209 = vsel %vm150, %v33, 0
  %v212 = vsel %vm150, %v34, 0
  %v215 = vsel %vm150, %v35, 0
  %v218 = vsel %vm150, %v36, 0
  %v221 = vsel %vm150, %v37, 0
  %v224 = vsel %vm150, %v38, 0
  %v227 = vsel %vm150, %v39, 0
  %v230 = vsel %vm150, %v40, 0
  %v233 = vsel %vm150, %v41, 0
  %v236 = vsel %vm150, %v42, 0
  %v239 = vsel %vm150, %v43, 0
  %v242 = vsel %vm150, %v44, 0
  %v245 = vsel %vm150, %v45, 0
  %v248 = vsel %vm150, %v46, 0
  %v251 = vsel %vm150, %v47, 0
  %v254 = vsel %vm150, %v48, 0
  %v257 = vsel %vm150, %v49, 0
  %v260 = vsel %vm150, %v50, 0
  %v263 = vsel %vm150, %v51, 0
  %v266 = vsel %vm150, %v52, 0
  %v269 = vsel %vm150, %v53, 0
  %v272 = vsel %vm150, %v54, 0
  %v275 = vsel %vm150, %v55, 0
  %v278 = vsel %vm150, %v56, 0
  %v281 = vsel %vm150, %v57, 0
  %v284 = vsel %vm150, %v58, 0
  %v287 = vsel %vm150, %v59, 0
  %v290 = vsel %vm150, %v60, 0
  %v293 = vsel %vm150, %v61, 0
  %v296 = vsel %vm150, %v62, 0
  %v299 = vsel %vm150, %v63, 0
  %v302 = vsel %vm150, %v64, 0
  %v305 = vsel %vm150, %v65, 0
  %v308 = vsel %vm150, %v66, 0
  %v311 = vsel %vm150, %v67, 0
  %v314 = vsel %vm150, %v68, 0
  %v317 = vsel %vm150, %v69, 0
  %v320 = vsel %vm150, %v70, 0
  %v323 = vsel %vm150, %v71, 0
  %v326 = vsel %vm150, %v72, 0
  %v329 = vsel %vm150, %v73, 0
  %v332 = vsel %vm150, %v74, 0
  %v335 = vsel %vm150, %v75, 0
  %v338 = vsel %vm150, %v76, 0
  %v341 = vsel %vm150, %v77, 0
  %v344 = vsel %vm150, %v78, 0
  %v347 = vsel %vm150, %v79, 0
  %v350 = vsel %vm150, %v80, 0
  %v353 = vsel %vm150, %v81, 0
  %v356 = vsel %vm150, %v82, 0
  %v359 = vsel %vm150, %v83, 0
  %v362 = vsel %vm150, %v84, 0
  %v365 = vsel %vm150, %v85, 0
  %v368 = vsel %vm150, %v86, 0
  %v371 = vsel %vm150, %v87, 0
  %v374 = vsel %vm150, %v88, 0
  %v377 = vsel %vm150, %v89, 0
  %v380 = vsel %vm150, %v90, 0
  %v383 = vsel %vm150, %v91, 0
  %v386 = vsel %vm150, %v92, 0
  %v389 = vsel %vm150, %v93, 0
  %v392 = vsel %vm150, %v94, 0
  %v395 = vsel %vm150, %v95, 0
  %v398 = vsel %vm150, %v96, 0
  %v401 = vsel %vm150, %v97, 0
  %v404 = vsel %vm150, %v98, 0
  %v407 = vsel %vm150, %v99, 0
  %v410 = vsel %vm150, %v100, 0
  %v413 = vsel %vm150, %v101, 0
  %v416 = vsel %vm150, %v102, 0
  %v419 = vsel %vm150, %v103, 0
  %v422 = vsel %vm150, %v104, 0
  %v425 = vsel %vm150, %v105, 0
  %v428 = vsel %vm150, %v106, 0
  %v431 = vsel %vm150, %v107, 0
  %v434 = vsel %vm150, %v108, 0
  %v437 = vsel %vm150, %v109, 0
  %v440 = vsel %vm150, %v110, 0
  %v443 = vsel %vm150, %v111, 0
  %v446 = vsel %vm150, %v112, 0
  %v449 = vsel %vm150, %v113, 0
  %v452 = vsel %vm150, %v114, 0
  %v455 = vsel %vm150, %v115, 0
  %v458 = vsel %vm150, %v116, 0
  %v461 = vsel %vm150, %v117, 0
  %v464 = vsel %vm150, %v118, 0
  %v467 = vsel %vm150, %v119, 0
  %v470 = vsel %vm150, %v120, 0
  %v473 = vsel %vm150, %v121, 0
  %v476 = vsel %vm150, %v122, 0
  %v479 = vsel %vm150, %v123, 0
  %v482 = vsel %vm150, %v124, 0
  %v485 = vsel %vm150, %v125, 0
  %v488 = vsel %vm150, %v126, 0
  %v491 = vsel %vm150, %v127, 0
  %v494 = vsel %vm150, %v128, 0
  %v497 = vsel %vm150, %v129, 0
  %v500 = vsel %vm150, %v130, 0
  %v503 = vsel %vm150, %v131, 0
  %v506 = vsel %vm150, %v132, 0
  %v509 = vsel %vm150, %v133, 0
  %v512 = vsel %vm150, %v134, 0
  %v515 = vsel %vm150, %v135, 0
  %v518 = vsel %vm150, %v136, 0
  %v521 = vsel %vm150, %v137, 0
  %v524 = vsel %vm150, %v138, 0
  %v527 = vsel %vm150, %v139, 0
  %v530 = vsel %vm150, %v140, 0
  %v533 = vsel %vm150, %v141, 0
  %535 = vmatpush.msra.mxu0 0.0
  %536 = vmatpush.msra.mxu0 0.0
  %537 = vmatpush.msra.mxu0 0.0
  %538 = vmatpush.msra.mxu0 0.0
  %539 = vmatpush.msra.mxu0 0.0
  %540 = vmatpush.msra.mxu0 0.0
  %541 = vmatpush.msra.mxu0 0.0
  %542 = vmatpush.msra.mxu0 0.0
  %543 = vmatpush.msra.mxu0 0.0
  %544 = vmatpush.msra.mxu0 0.0
  %545 = vmatpush.msra.mxu0 0.0
  %546 = vmatpush.msra.mxu0 0.0
  %547 = vmatpush.msra.mxu0 %v145
  %548 = vmatpush.msra.mxu0 %v144
  %549 = vmatpush.msra.mxu0 %v143
  %550 = vmatpush.msra.mxu0 %v142
  %551 = vmatmul.f32.gmra.mxu0 %v152
  %v552 = vpop.f32.mrf.mxu0
  %v553 = vadd.f32 %v148, %v552
  %554 = vmatmul.f32.gmra.mxu0 %v155
  %v555 = vpop.f32.mrf.mxu0
  %v556 = vadd.f32 %v148, %v555
  %557 = vmatmul.f32.gmra.mxu0 %v158
  %v558 = vpop.f32.mrf.mxu0
  %v559 = vadd.f32 %v148, %v558
  %560 = vmatmul.f32.gmra.mxu0 %v161
  %v561 = vpop.f32.mrf.mxu0
  %v562 = vadd.f32 %v148, %v561
  %563 = vmatmul.f32.gmra.mxu0 %v164
  %v564 = vpop.f32.mrf.mxu0
  %v565 = vadd.f32 %v148, %v564
  %566 = vmatmul.f32.gmra.mxu0 %v167
  %v567 = vpop.f32.mrf.mxu0
  %v568 = vadd.f32 %v148, %v567
  %569 = vmatmul.f32.gmra.mxu0 %v170
  %v570 = vpop.f32.mrf.mxu0
  %v571 = vadd.f32 %v148, %v570
  %572 = vmatmul.f32.gmra.mxu0 %v173
  %v573 = vpop.f32.mrf.mxu0
  %v574 = vadd.f32 %v148, %v573
  %575 = vmatmul.f32.gmra.mxu0 %v176
  %v576 = vpop.f32.mrf.mxu0
  %v577 = vadd.f32 %v148, %v576
  %578 = vmatmul.f32.gmra.mxu0 %v179
  %v579 = vpop.f32.mrf.mxu0
  %v580 = vadd.f32 %v148, %v579
  %581 = vmatmul.f32.gmra.mxu0 %v182
  %v582 = vpop.f32.mrf.mxu0
  %v583 = vadd.f32 %v148, %v582
  %584 = vmatmul.f32.gmra.mxu0 %v185
  %v585 = vpop.f32.mrf.mxu0
  %v586 = vadd.f32 %v148, %v585
  %587 = vmatmul.f32.gmra.mxu0 %v188
  %v588 = vpop.f32.mrf.mxu0
  %v589 = vadd.f32 %v148, %v588
  %590 = vmatmul.f32.gmra.mxu0 %v191
  %v591 = vpop.f32.mrf.mxu0
  %v592 = vadd.f32 %v148, %v591
  %593 = vmatmul.f32.gmra.mxu0 %v194
  %v594 = vpop.f32.mrf.mxu0
  %v595 = vadd.f32 %v148, %v594
  %596 = vmatmul.f32.gmra.mxu0 %v197
  %v597 = vpop.f32.mrf.mxu0
  %v598 = vadd.f32 %v148, %v597
  %599 = vmatmul.f32.gmra.mxu0 %v200
  %v600 = vpop.f32.mrf.mxu0
  %v601 = vadd.f32 %v148, %v600
  %602 = vmatmul.f32.gmra.mxu0 %v203
  %v603 = vpop.f32.mrf.mxu0
  %v604 = vadd.f32 %v148, %v603
  %605 = vmatmul.f32.gmra.mxu0 %v206
  %v606 = vpop.f32.mrf.mxu0
  %v607 = vadd.f32 %v148, %v606
  %608 = vmatmul.f32.gmra.mxu0 %v209
  %v609 = vpop.f32.mrf.mxu0
  %v610 = vadd.f32 %v148, %v609
  %611 = vmatmul.f32.gmra.mxu0 %v212
  %v612 = vpop.f32.mrf.mxu0
  %v613 = vadd.f32 %v148, %v612
  %614 = vmatmul.f32.gmra.mxu0 %v215
  %v615 = vpop.f32.mrf.mxu0
  %v616 = vadd.f32 %v148, %v615
  %617 = vmatmul.f32.gmra.mxu0 %v218
  %v618 = vpop.f32.mrf.mxu0
  %v619 = vadd.f32 %v148, %v618
  %620 = vmatmul.f32.gmra.mxu0 %v221
  %v621 = vpop.f32.mrf.mxu0
  %v622 = vadd.f32 %v148, %v621
  %623 = vmatmul.f32.gmra.mxu0 %v224
  %v624 = vpop.f32.mrf.mxu0
  %v625 = vadd.f32 %v148, %v624
  %626 = vmatmul.f32.gmra.mxu0 %v227
  %v627 = vpop.f32.mrf.mxu0
  %v628 = vadd.f32 %v148, %v627
  %629 = vmatmul.f32.gmra.mxu0 %v230
  %v630 = vpop.f32.mrf.mxu0
  %v631 = vadd.f32 %v148, %v630
  %632 = vmatmul.f32.gmra.mxu0 %v233
  %v633 = vpop.f32.mrf.mxu0
  %v634 = vadd.f32 %v148, %v633
  %635 = vmatmul.f32.gmra.mxu0 %v236
  %v636 = vpop.f32.mrf.mxu0
  %v637 = vadd.f32 %v148, %v636
  %638 = vmatmul.f32.gmra.mxu0 %v239
  %v639 = vpop.f32.mrf.mxu0
  %v640 = vadd.f32 %v148, %v639
  %641 = vmatmul.f32.gmra.mxu0 %v242
  %v642 = vpop.f32.mrf.mxu0
  %v643 = vadd.f32 %v148, %v642
  %644 = vmatmul.f32.gmra.mxu0 %v245
  %v645 = vpop.f32.mrf.mxu0
  %v646 = vadd.f32 %v148, %v645
  %647 = vmatmul.f32.gmra.mxu0 %v248
  %v648 = vpop.f32.mrf.mxu0
  %v649 = vadd.f32 %v148, %v648
  %650 = vmatmul.f32.gmra.mxu0 %v251
  %v651 = vpop.f32.mrf.mxu0
  %v652 = vadd.f32 %v148, %v651
  %653 = vmatmul.f32.gmra.mxu0 %v254
  %v654 = vpop.f32.mrf.mxu0
  %v655 = vadd.f32 %v148, %v654
  %656 = vmatmul.f32.gmra.mxu0 %v257
  %v657 = vpop.f32.mrf.mxu0
  %v658 = vadd.f32 %v148, %v657
  %659 = vmatmul.f32.gmra.mxu0 %v260
  %v660 = vpop.f32.mrf.mxu0
  %v661 = vadd.f32 %v148, %v660
  %662 = vmatmul.f32.gmra.mxu0 %v263
  %v663 = vpop.f32.mrf.mxu0
  %v664 = vadd.f32 %v148, %v663
  %665 = vmatmul.f32.gmra.mxu0 %v266
  %v666 = vpop.f32.mrf.mxu0
  %v667 = vadd.f32 %v148, %v666
  %668 = vmatmul.f32.gmra.mxu0 %v269
  %v669 = vpop.f32.mrf.mxu0
  %v670 = vadd.f32 %v148, %v669
  %671 = vmatmul.f32.gmra.mxu0 %v272
  %v672 = vpop.f32.mrf.mxu0
  %v673 = vadd.f32 %v148, %v672
  %674 = vmatmul.f32.gmra.mxu0 %v275
  %v675 = vpop.f32.mrf.mxu0
  %v676 = vadd.f32 %v148, %v675
  %677 = vmatmul.f32.gmra.mxu0 %v278
  %v678 = vpop.f32.mrf.mxu0
  %v679 = vadd.f32 %v148, %v678
  %680 = vmatmul.f32.gmra.mxu0 %v281
  %v681 = vpop.f32.mrf.mxu0
  %v682 = vadd.f32 %v148, %v681
  %683 = vmatmul.f32.gmra.mxu0 %v284
  %v684 = vpop.f32.mrf.mxu0
  %v685 = vadd.f32 %v148, %v684
  %686 = vmatmul.f32.gmra.mxu0 %v287
  %v687 = vpop.f32.mrf.mxu0
  %v688 = vadd.f32 %v148, %v687
  %689 = vmatmul.f32.gmra.mxu0 %v290
  %v690 = vpop.f32.mrf.mxu0
  %v691 = vadd.f32 %v148, %v690
  %692 = vmatmul.f32.gmra.mxu0 %v293
  %v693 = vpop.f32.mrf.mxu0
  %v694 = vadd.f32 %v148, %v693
  %695 = vmatmul.f32.gmra.mxu0 %v296
  %v696 = vpop.f32.mrf.mxu0
  %v697 = vadd.f32 %v148, %v696
  %698 = vmatmul.f32.gmra.mxu0 %v299
  %v699 = vpop.f32.mrf.mxu0
  %v700 = vadd.f32 %v148, %v699
  %701 = vmatmul.f32.gmra.mxu0 %v302
  %v702 = vpop.f32.mrf.mxu0
  %v703 = vadd.f32 %v148, %v702
  %704 = vmatmul.f32.gmra.mxu0 %v305
  %v705 = vpop.f32.mrf.mxu0
  %v706 = vadd.f32 %v148, %v705
  %707 = vmatmul.f32.gmra.mxu0 %v308
  %v708 = vpop.f32.mrf.mxu0
  %v709 = vadd.f32 %v148, %v708
  %710 = vmatmul.f32.gmra.mxu0 %v311
  %v711 = vpop.f32.mrf.mxu0
  %v712 = vadd.f32 %v148, %v711
  %713 = vmatmul.f32.gmra.mxu0 %v314
  %v714 = vpop.f32.mrf.mxu0
  %v715 = vadd.f32 %v148, %v714
  %716 = vmatmul.f32.gmra.mxu0 %v317
  %v717 = vpop.f32.mrf.mxu0
  %v718 = vadd.f32 %v148, %v717
  %719 = vmatmul.f32.gmra.mxu0 %v320
  %v720 = vpop.f32.mrf.mxu0
  %v721 = vadd.f32 %v148, %v720
  %722 = vmatmul.f32.gmra.mxu0 %v323
  %v723 = vpop.f32.mrf.mxu0
  %v724 = vadd.f32 %v148, %v723
  %725 = vmatmul.f32.gmra.mxu0 %v326
  %v726 = vpop.f32.mrf.mxu0
  %v727 = vadd.f32 %v148, %v726
  %728 = vmatmul.f32.gmra.mxu0 %v329
  %v729 = vpop.f32.mrf.mxu0
  %v730 = vadd.f32 %v148, %v729
  %731 = vmatmul.f32.gmra.mxu0 %v332
  %v732 = vpop.f32.mrf.mxu0
  %v733 = vadd.f32 %v148, %v732
  %734 = vmatmul.f32.gmra.mxu0 %v335
  %v735 = vpop.f32.mrf.mxu0
  %v736 = vadd.f32 %v148, %v735
  %737 = vmatmul.f32.gmra.mxu0 %v338
  %v738 = vpop.f32.mrf.mxu0
  %v739 = vadd.f32 %v148, %v738
  %740 = vmatmul.f32.gmra.mxu0 %v341
  %v741 = vpop.f32.mrf.mxu0
  %v742 = vadd.f32 %v148, %v741
  %743 = vmatmul.f32.gmra.mxu0 %v344
  %v744 = vpop.f32.mrf.mxu0
  %v745 = vadd.f32 %v148, %v744
  %746 = vmatmul.f32.gmra.mxu0 %v347
  %v747 = vpop.f32.mrf.mxu0
  %v748 = vadd.f32 %v148, %v747
  %749 = vmatmul.f32.gmra.mxu0 %v350
  %v750 = vpop.f32.mrf.mxu0
  %v751 = vadd.f32 %v148, %v750
  %752 = vmatmul.f32.gmra.mxu0 %v353
  %v753 = vpop.f32.mrf.mxu0
  %v754 = vadd.f32 %v148, %v753
  %755 = vmatmul.f32.gmra.mxu0 %v356
  %v756 = vpop.f32.mrf.mxu0
  %v757 = vadd.f32 %v148, %v756
  %758 = vmatmul.f32.gmra.mxu0 %v359
  %v759 = vpop.f32.mrf.mxu0
  %v760 = vadd.f32 %v148, %v759
  %761 = vmatmul.f32.gmra.mxu0 %v362
  %v762 = vpop.f32.mrf.mxu0
  %v763 = vadd.f32 %v148, %v762
  %764 = vmatmul.f32.gmra.mxu0 %v365
  %v765 = vpop.f32.mrf.mxu0
  %v766 = vadd.f32 %v148, %v765
  %767 = vmatmul.f32.gmra.mxu0 %v368
  %v768 = vpop.f32.mrf.mxu0
  %v769 = vadd.f32 %v148, %v768
  %770 = vmatmul.f32.gmra.mxu0 %v371
  %v771 = vpop.f32.mrf.mxu0
  %v772 = vadd.f32 %v148, %v771
  %773 = vmatmul.f32.gmra.mxu0 %v374
  %v774 = vpop.f32.mrf.mxu0
  %v775 = vadd.f32 %v148, %v774
  %776 = vmatmul.f32.gmra.mxu0 %v377
  %v777 = vpop.f32.mrf.mxu0
  %v778 = vadd.f32 %v148, %v777
  %779 = vmatmul.f32.gmra.mxu0 %v380
  %v780 = vpop.f32.mrf.mxu0
  %v781 = vadd.f32 %v148, %v780
  %782 = vmatmul.f32.gmra.mxu0 %v383
  %v783 = vpop.f32.mrf.mxu0
  %v784 = vadd.f32 %v148, %v783
  %785 = vmatmul.f32.gmra.mxu0 %v386
  %v786 = vpop.f32.mrf.mxu0
  %v787 = vadd.f32 %v148, %v786
  %788 = vmatmul.f32.gmra.mxu0 %v389
  %v789 = vpop.f32.mrf.mxu0
  %v790 = vadd.f32 %v148, %v789
  %791 = vmatmul.f32.gmra.mxu0 %v392
  %v792 = vpop.f32.mrf.mxu0
  %v793 = vadd.f32 %v148, %v792
  %794 = vmatmul.f32.gmra.mxu0 %v395
  %v795 = vpop.f32.mrf.mxu0
  %v796 = vadd.f32 %v148, %v795
  %797 = vmatmul.f32.gmra.mxu0 %v398
  %v798 = vpop.f32.mrf.mxu0
  %v799 = vadd.f32 %v148, %v798
  %800 = vmatmul.f32.gmra.mxu0 %v401
  %v801 = vpop.f32.mrf.mxu0
  %v802 = vadd.f32 %v148, %v801
  %803 = vmatmul.f32.gmra.mxu0 %v404
  %v804 = vpop.f32.mrf.mxu0
  %v805 = vadd.f32 %v148, %v804
  %806 = vmatmul.f32.gmra.mxu0 %v407
  %v807 = vpop.f32.mrf.mxu0
  %v808 = vadd.f32 %v148, %v807
  %809 = vmatmul.f32.gmra.mxu0 %v410
  %v810 = vpop.f32.mrf.mxu0
  %v811 = vadd.f32 %v148, %v810
  %812 = vmatmul.f32.gmra.mxu0 %v413
  %v813 = vpop.f32.mrf.mxu0
  %v814 = vadd.f32 %v148, %v813
  %815 = vmatmul.f32.gmra.mxu0 %v416
  %v816 = vpop.f32.mrf.mxu0
  %v817 = vadd.f32 %v148, %v816
  %818 = vmatmul.f32.gmra.mxu0 %v419
  %v819 = vpop.f32.mrf.mxu0
  %v820 = vadd.f32 %v148, %v819
  %821 = vmatmul.f32.gmra.mxu0 %v422
  %v822 = vpop.f32.mrf.mxu0
  %v823 = vadd.f32 %v148, %v822
  %824 = vmatmul.f32.gmra.mxu0 %v425
  %v825 = vpop.f32.mrf.mxu0
  %v826 = vadd.f32 %v148, %v825
  %827 = vmatmul.f32.gmra.mxu0 %v428
  %v828 = vpop.f32.mrf.mxu0
  %v829 = vadd.f32 %v148, %v828
  %830 = vmatmul.f32.gmra.mxu0 %v431
  %v831 = vpop.f32.mrf.mxu0
  %v832 = vadd.f32 %v148, %v831
  %833 = vmatmul.f32.gmra.mxu0 %v434
  %v834 = vpop.f32.mrf.mxu0
  %v835 = vadd.f32 %v148, %v834
  %836 = vmatmul.f32.gmra.mxu0 %v437
  %v837 = vpop.f32.mrf.mxu0
  %v838 = vadd.f32 %v148, %v837
  %839 = vmatmul.f32.gmra.mxu0 %v440
  %v840 = vpop.f32.mrf.mxu0
  %v841 = vadd.f32 %v148, %v840
  %842 = vmatmul.f32.gmra.mxu0 %v443
  %v843 = vpop.f32.mrf.mxu0
  %v844 = vadd.f32 %v148, %v843
  %845 = vmatmul.f32.gmra.mxu0 %v446
  %v846 = vpop.f32.mrf.mxu0
  %v847 = vadd.f32 %v148, %v846
  %848 = vmatmul.f32.gmra.mxu0 %v449
  %v849 = vpop.f32.mrf.mxu0
  %v850 = vadd.f32 %v148, %v849
  %851 = vmatmul.f32.gmra.mxu0 %v452
  %v852 = vpop.f32.mrf.mxu0
  %v853 = vadd.f32 %v148, %v852
  %854 = vmatmul.f32.gmra.mxu0 %v455
  %v855 = vpop.f32.mrf.mxu0
  %v856 = vadd.f32 %v148, %v855
  %857 = vmatmul.f32.gmra.mxu0 %v458
  %v858 = vpop.f32.mrf.mxu0
  %v859 = vadd.f32 %v148, %v858
  %860 = vmatmul.f32.gmra.mxu0 %v461
  %v861 = vpop.f32.mrf.mxu0
  %v862 = vadd.f32 %v148, %v861
  %863 = vmatmul.f32.gmra.mxu0 %v464
  %v864 = vpop.f32.mrf.mxu0
  %v865 = vadd.f32 %v148, %v864
  %866 = vmatmul.f32.gmra.mxu0 %v467
  %v867 = vpop.f32.mrf.mxu0
  %v868 = vadd.f32 %v148, %v867
  %869 = vmatmul.f32.gmra.mxu0 %v470
  %v870 = vpop.f32.mrf.mxu0
  %v871 = vadd.f32 %v148, %v870
  %872 = vmatmul.f32.gmra.mxu0 %v473
  %v873 = vpop.f32.mrf.mxu0
  %v874 = vadd.f32 %v148, %v873
  %875 = vmatmul.f32.gmra.mxu0 %v476
  %v876 = vpop.f32.mrf.mxu0
  %v877 = vadd.f32 %v148, %v876
  %878 = vmatmul.f32.gmra.mxu0 %v479
  %v879 = vpop.f32.mrf.mxu0
  %v880 = vadd.f32 %v148, %v879
  %881 = vmatmul.f32.gmra.mxu0 %v482
  %v882 = vpop.f32.mrf.mxu0
  %v883 = vadd.f32 %v148, %v882
  %884 = vmatmul.f32.gmra.mxu0 %v485
  %v885 = vpop.f32.mrf.mxu0
  %v886 = vadd.f32 %v148, %v885
  %887 = vmatmul.f32.gmra.mxu0 %v488
  %v888 = vpop.f32.mrf.mxu0
  %v889 = vadd.f32 %v148, %v888
  %890 = vmatmul.f32.gmra.mxu0 %v491
  %v891 = vpop.f32.mrf.mxu0
  %v892 = vadd.f32 %v148, %v891
  %893 = vmatmul.f32.gmra.mxu0 %v494
  %v894 = vpop.f32.mrf.mxu0
  %v895 = vadd.f32 %v148, %v894
  %896 = vmatmul.f32.gmra.mxu0 %v497
  %v897 = vpop.f32.mrf.mxu0
  %v898 = vadd.f32 %v148, %v897
  %899 = vmatmul.f32.gmra.mxu0 %v500
  %v900 = vpop.f32.mrf.mxu0
  %v901 = vadd.f32 %v148, %v900
  %902 = vmatmul.f32.gmra.mxu0 %v503
  %v903 = vpop.f32.mrf.mxu0
  %v904 = vadd.f32 %v148, %v903
  %905 = vmatmul.f32.gmra.mxu0 %v506
  %v906 = vpop.f32.mrf.mxu0
  %v907 = vadd.f32 %v148, %v906
  %908 = vmatmul.f32.gmra.mxu0 %v509
  %v909 = vpop.f32.mrf.mxu0
  %v910 = vadd.f32 %v148, %v909
  %911 = vmatmul.f32.gmra.mxu0 %v512
  %v912 = vpop.f32.mrf.mxu0
  %v913 = vadd.f32 %v148, %v912
  %914 = vmatmul.f32.gmra.mxu0 %v515
  %v915 = vpop.f32.mrf.mxu0
  %v916 = vadd.f32 %v148, %v915
  %917 = vmatmul.f32.gmra.mxu0 %v518
  %v918 = vpop.f32.mrf.mxu0
  %v919 = vadd.f32 %v148, %v918
  %920 = vmatmul.f32.gmra.mxu0 %v521
  %v921 = vpop.f32.mrf.mxu0
  %v922 = vadd.f32 %v148, %v921
  %923 = vmatmul.f32.gmra.mxu0 %v524
  %v924 = vpop.f32.mrf.mxu0
  %v925 = vadd.f32 %v148, %v924
  %926 = vmatmul.f32.gmra.mxu0 %v527
  %v927 = vpop.f32.mrf.mxu0
  %v928 = vadd.f32 %v148, %v927
  %929 = vmatmul.f32.gmra.mxu0 %v530
  %v930 = vpop.f32.mrf.mxu0
  %v931 = vadd.f32 %v148, %v930
  %932 = vmatmul.f32.gmra.mxu0 %v533
  %v933 = vpop.f32.mrf.mxu0
  %v934 = vadd.f32 %v148, %v933
  %935 = vdwg.mxu0
  %vm936 = vcmask 64512
  %937 = vst.msk [vmem:[%s3] sm:$0xff] %vm936, %v553
  %938 = vst.msk [vmem:[%s3 + $0x8] sm:$0xff] %vm936, %v556
  %939 = vst.msk [vmem:[%s3 + $0x10] sm:$0xff] %vm936, %v559
  %940 = vst.msk [vmem:[%s3 + $0x18] sm:$0xff] %vm936, %v562
  %941 = vst.msk [vmem:[%s3 + $0x20] sm:$0xff] %vm936, %v565
  %942 = vst.msk [vmem:[%s3 + $0x28] sm:$0xff] %vm936, %v568
  %943 = vst.msk [vmem:[%s3 + $0x30] sm:$0xff] %vm936, %v571
  %944 = vst.msk [vmem:[%s3 + $0x38] sm:$0xff] %vm936, %v574
  %945 = vst.msk [vmem:[%s3 + $0x40] sm:$0xff] %vm936, %v577
  %946 = vst.msk [vmem:[%s3 + $0x48] sm:$0xff] %vm936, %v580
  %947 = vst.msk [vmem:[%s3 + $0x50] sm:$0xff] %vm936, %v583
  %948 = vst.msk [vmem:[%s3 + $0x58] sm:$0xff] %vm936, %v586
  %949 = vst.msk [vmem:[%s3 + $0x60] sm:$0xff] %vm936, %v589
  %950 = vst.msk [vmem:[%s3 + $0x68] sm:$0xff] %vm936, %v592
  %951 = vst.msk [vmem:[%s3 + $0x70] sm:$0xff] %vm936, %v595
  %952 = vst.msk [vmem:[%s3 + $0x78] sm:$0xff] %vm936, %v598
  %953 = vst.msk [vmem:[%s3 + $0x80] sm:$0xff] %vm936, %v601
  %954 = vst.msk [vmem:[%s3 + $0x88] sm:$0xff] %vm936, %v604
  %955 = vst.msk [vmem:[%s3 + $0x90] sm:$0xff] %vm936, %v607
  %956 = vst.msk [vmem:[%s3 + $0x98] sm:$0xff] %vm936, %v610
  %957 = vst.msk [vmem:[%s3 + $0xa0] sm:$0xff] %vm936, %v613
  %958 = vst.msk [vmem:[%s3 + $0xa8] sm:$0xff] %vm936, %v616
  %959 = vst.msk [vmem:[%s3 + $0xb0] sm:$0xff] %vm936, %v619
  %960 = vst.msk [vmem:[%s3 + $0xb8] sm:$0xff] %vm936, %v622
  %961 = vst.msk [vmem:[%s3 + $0xc0] sm:$0xff] %vm936, %v625
  %962 = vst.msk [vmem:[%s3 + $0xc8] sm:$0xff] %vm936, %v628
  %963 = vst.msk [vmem:[%s3 + $0xd0] sm:$0xff] %vm936, %v631
  %964 = vst.msk [vmem:[%s3 + $0xd8] sm:$0xff] %vm936, %v634
  %965 = vst.msk [vmem:[%s3 + $0xe0] sm:$0xff] %vm936, %v637
  %966 = vst.msk [vmem:[%s3 + $0xe8] sm:$0xff] %vm936, %v640
  %967 = vst.msk [vmem:[%s3 + $0xf0] sm:$0xff] %vm936, %v643
  %968 = vst.msk [vmem:[%s3 + $0xf8] sm:$0xff] %vm936, %v646
  %969 = vst.msk [vmem:[%s3 + $0x100] sm:$0xff] %vm936, %v649
  %970 = vst.msk [vmem:[%s3 + $0x108] sm:$0xff] %vm936, %v652
  %971 = vst.msk [vmem:[%s3 + $0x110] sm:$0xff] %vm936, %v655
  %972 = vst.msk [vmem:[%s3 + $0x118] sm:$0xff] %vm936, %v658
  %973 = vst.msk [vmem:[%s3 + $0x120] sm:$0xff] %vm936, %v661
  %974 = vst.msk [vmem:[%s3 + $0x128] sm:$0xff] %vm936, %v664
  %975 = vst.msk [vmem:[%s3 + $0x130] sm:$0xff] %vm936, %v667
  %976 = vst.msk [vmem:[%s3 + $0x138] sm:$0xff] %vm936, %v670
  %977 = vst.msk [vmem:[%s3 + $0x140] sm:$0xff] %vm936, %v673
  %978 = vst.msk [vmem:[%s3 + $0x148] sm:$0xff] %vm936, %v676
  %979 = vst.msk [vmem:[%s3 + $0x150] sm:$0xff] %vm936, %v679
  %980 = vst.msk [vmem:[%s3 + $0x158] sm:$0xff] %vm936, %v682
  %981 = vst.msk [vmem:[%s3 + $0x160] sm:$0xff] %vm936, %v685
  %982 = vst.msk [vmem:[%s3 + $0x168] sm:$0xff] %vm936, %v688
  %983 = vst.msk [vmem:[%s3 + $0x170] sm:$0xff] %vm936, %v691
  %984 = vst.msk [vmem:[%s3 + $0x178] sm:$0xff] %vm936, %v694
  %985 = vst.msk [vmem:[%s3 + $0x180] sm:$0xff] %vm936, %v697
  %986 = vst.msk [vmem:[%s3 + $0x188] sm:$0xff] %vm936, %v700
  %987 = vst.msk [vmem:[%s3 + $0x190] sm:$0xff] %vm936, %v703
  %988 = vst.msk [vmem:[%s3 + $0x198] sm:$0xff] %vm936, %v706
  %989 = vst.msk [vmem:[%s3 + $0x1a0] sm:$0xff] %vm936, %v709
  %990 = vst.msk [vmem:[%s3 + $0x1a8] sm:$0xff] %vm936, %v712
  %991 = vst.msk [vmem:[%s3 + $0x1b0] sm:$0xff] %vm936, %v715
  %992 = vst.msk [vmem:[%s3 + $0x1b8] sm:$0xff] %vm936, %v718
  %993 = vst.msk [vmem:[%s3 + $0x1c0] sm:$0xff] %vm936, %v721
  %994 = vst.msk [vmem:[%s3 + $0x1c8] sm:$0xff] %vm936, %v724
  %995 = vst.msk [vmem:[%s3 + $0x1d0] sm:$0xff] %vm936, %v727
  %996 = vst.msk [vmem:[%s3 + $0x1d8] sm:$0xff] %vm936, %v730
  %997 = vst.msk [vmem:[%s3 + $0x1e0] sm:$0xff] %vm936, %v733
  %998 = vst.msk [vmem:[%s3 + $0x1e8] sm:$0xff] %vm936, %v736
  %999 = vst.msk [vmem:[%s3 + $0x1f0] sm:$0xff] %vm936, %v739
  %1000 = vst.msk [vmem:[%s3 + $0x1f8] sm:$0xff] %vm936, %v742
  %1001 = vst.msk [vmem:[%s3 + $0x200] sm:$0xff] %vm936, %v745
  %1002 = vst.msk [vmem:[%s3 + $0x208] sm:$0xff] %vm936, %v748
  %1003 = vst.msk [vmem:[%s3 + $0x210] sm:$0xff] %vm936, %v751
  %1004 = vst.msk [vmem:[%s3 + $0x218] sm:$0xff] %vm936, %v754
  %1005 = vst.msk [vmem:[%s3 + $0x220] sm:$0xff] %vm936, %v757
  %1006 = vst.msk [vmem:[%s3 + $0x228] sm:$0xff] %vm936, %v760
  %1007 = vst.msk [vmem:[%s3 + $0x230] sm:$0xff] %vm936, %v763
  %1008 = vst.msk [vmem:[%s3 + $0x238] sm:$0xff] %vm936, %v766
  %1009 = vst.msk [vmem:[%s3 + $0x240] sm:$0xff] %vm936, %v769
  %1010 = vst.msk [vmem:[%s3 + $0x248] sm:$0xff] %vm936, %v772
  %1011 = vst.msk [vmem:[%s3 + $0x250] sm:$0xff] %vm936, %v775
  %1012 = vst.msk [vmem:[%s3 + $0x258] sm:$0xff] %vm936, %v778
  %1013 = vst.msk [vmem:[%s3 + $0x260] sm:$0xff] %vm936, %v781
  %1014 = vst.msk [vmem:[%s3 + $0x268] sm:$0xff] %vm936, %v784
  %1015 = vst.msk [vmem:[%s3 + $0x270] sm:$0xff] %vm936, %v787
  %1016 = vst.msk [vmem:[%s3 + $0x278] sm:$0xff] %vm936, %v790
  %1017 = vst.msk [vmem:[%s3 + $0x280] sm:$0xff] %vm936, %v793
  %1018 = vst.msk [vmem:[%s3 + $0x288] sm:$0xff] %vm936, %v796
  %1019 = vst.msk [vmem:[%s3 + $0x290] sm:$0xff] %vm936, %v799
  %1020 = vst.msk [vmem:[%s3 + $0x298] sm:$0xff] %vm936, %v802
  %1021 = vst.msk [vmem:[%s3 + $0x2a0] sm:$0xff] %vm936, %v805
  %1022 = vst.msk [vmem:[%s3 + $0x2a8] sm:$0xff] %vm936, %v808
  %1023 = vst.msk [vmem:[%s3 + $0x2b0] sm:$0xff] %vm936, %v811
  %1024 = vst.msk [vmem:[%s3 + $0x2b8] sm:$0xff] %vm936, %v814
  %1025 = vst.msk [vmem:[%s3 + $0x2c0] sm:$0xff] %vm936, %v817
  %1026 = vst.msk [vmem:[%s3 + $0x2c8] sm:$0xff] %vm936, %v820
  %1027 = vst.msk [vmem:[%s3 + $0x2d0] sm:$0xff] %vm936, %v823
  %1028 = vst.msk [vmem:[%s3 + $0x2d8] sm:$0xff] %vm936, %v826
  %1029 = vst.msk [vmem:[%s3 + $0x2e0] sm:$0xff] %vm936, %v829
  %1030 = vst.msk [vmem:[%s3 + $0x2e8] sm:$0xff] %vm936, %v832
  %1031 = vst.msk [vmem:[%s3 + $0x2f0] sm:$0xff] %vm936, %v835
  %1032 = vst.msk [vmem:[%s3 + $0x2f8] sm:$0xff] %vm936, %v838
  %1033 = vst.msk [vmem:[%s3 + $0x300] sm:$0xff] %vm936, %v841
  %1034 = vst.msk [vmem:[%s3 + $0x308] sm:$0xff] %vm936, %v844
  %1035 = vst.msk [vmem:[%s3 + $0x310] sm:$0xff] %vm936, %v847
  %1036 = vst.msk [vmem:[%s3 + $0x318] sm:$0xff] %vm936, %v850
  %1037 = vst.msk [vmem:[%s3 + $0x320] sm:$0xff] %vm936, %v853
  %1038 = vst.msk [vmem:[%s3 + $0x328] sm:$0xff] %vm936, %v856
  %1039 = vst.msk [vmem:[%s3 + $0x330] sm:$0xff] %vm936, %v859
  %1040 = vst.msk [vmem:[%s3 + $0x338] sm:$0xff] %vm936, %v862
  %1041 = vst.msk [vmem:[%s3 + $0x340] sm:$0xff] %vm936, %v865
  %1042 = vst.msk [vmem:[%s3 + $0x348] sm:$0xff] %vm936, %v868
  %1043 = vst.msk [vmem:[%s3 + $0x350] sm:$0xff] %vm936, %v871
  %1044 = vst.msk [vmem:[%s3 + $0x358] sm:$0xff] %vm936, %v874
  %1045 = vst.msk [vmem:[%s3 + $0x360] sm:$0xff] %vm936, %v877
  %1046 = vst.msk [vmem:[%s3 + $0x368] sm:$0xff] %vm936, %v880
  %1047 = vst.msk [vmem:[%s3 + $0x370] sm:$0xff] %vm936, %v883
  %1048 = vst.msk [vmem:[%s3 + $0x378] sm:$0xff] %vm936, %v886
  %1049 = vst.msk [vmem:[%s3 + $0x380] sm:$0xff] %vm936, %v889
  %1050 = vst.msk [vmem:[%s3 + $0x388] sm:$0xff] %vm936, %v892
  %1051 = vst.msk [vmem:[%s3 + $0x390] sm:$0xff] %vm936, %v895
  %1052 = vst.msk [vmem:[%s3 + $0x398] sm:$0xff] %vm936, %v898
  %1053 = vst.msk [vmem:[%s3 + $0x3a0] sm:$0xff] %vm936, %v901
  %1054 = vst.msk [vmem:[%s3 + $0x3a8] sm:$0xff] %vm936, %v904
  %1055 = vst.msk [vmem:[%s3 + $0x3b0] sm:$0xff] %vm936, %v907
  %1056 = vst.msk [vmem:[%s3 + $0x3b8] sm:$0xff] %vm936, %v910
  %1057 = vst.msk [vmem:[%s3 + $0x3c0] sm:$0xff] %vm936, %v913
  %1058 = vst.msk [vmem:[%s3 + $0x3c8] sm:$0xff] %vm936, %v916
  %1059 = vst.msk [vmem:[%s3 + $0x3d0] sm:$0xff] %vm936, %v919
  %1060 = vst.msk [vmem:[%s3 + $0x3d8] sm:$0xff] %vm936, %v922
  %1061 = vst.msk [vmem:[%s3 + $0x3e0] sm:$0xff] %vm936, %v925
  %1062 = vst.msk [vmem:[%s3 + $0x3e8] sm:$0xff] %vm936, %v928
  %1063 = vst.msk [vmem:[%s3 + $0x3f0] sm:$0xff] %vm936, %v931
  %1064 = vst.msk [vmem:[%s3 + $0x3f8] sm:$0xff] %vm936, %v934
  // Predicated region
  $region14: #{tpu_custom_call.1} parent=0 // pred_check
    _
  $region15: #{tpu_custom_call.1} parent=0 // pred_check_branch
    %1066 = sbr.rel (0) target = $region17
  $region16: #{tpu_custom_call.1} parent=0 // pred_region
    _
  $region17: #{tpu_custom_call.1} parent=0 // pred_fallthru
    _
  // Predicated region
  $region18: #{tpu_custom_call.1} parent=0 // pred_check
    _
  $region19: #{tpu_custom_call.1} parent=0 // pred_check_branch
    %1068 = sbr.rel (0) target = $region21
  $region20: #{tpu_custom_call.1} parent=0 // pred_region
    _
  $region21: #{tpu_custom_call.1} parent=0 // pred_fallthru
    _

</llo_original>
